<compile_context>
chip_gen: v7x
topology: tpu7x:2x2x1
jax: 0.10.0
libtpu: 0.0.40
codegen_flags: <defaults>
</compile_context>

<pallas_src>
import math

import jax
import jax.numpy as jnp
from jax import lax
from jax.experimental import pallas as pl
from jax.experimental.pallas import tpu as pltpu


NEG_INF_FILL = -1e9   # plain Python float (torch masked_fill value); NOT a jnp array
                      # so the kernel does not capture an array constant.


# ----------------------------------------------------------------------------
# Kernel 1: row-tiled, K-tiled linear layer  y = x @ W + b
#           (optionally splits the output columns -> used for the fused QKV proj)
# ----------------------------------------------------------------------------
def _make_linear_kernel(n_splits, split_width):
    def kernel(x_ref, w_ref, b_ref, *rest):
        out_refs = rest[:n_splits]
        acc_ref = rest[n_splits]
        k_idx = pl.program_id(1)

        @pl.when(k_idx == 0)
        def _():
            acc_ref[...] = jnp.zeros_like(acc_ref)

        acc_ref[...] += jnp.dot(x_ref[...], w_ref[...],
                                preferred_element_type=jnp.float32)

        @pl.when(k_idx == pl.num_programs(1) - 1)
        def _():
            y = acc_ref[...] + b_ref[...]
            for s, o_ref in enumerate(out_refs):
                lo = s * split_width
                o_ref[...] = y[:, lo:lo + split_width].astype(o_ref.dtype)

    return kernel


def _pick_block_k(k_dim):
    # K tile must divide K exactly (it is a reduction axis); fall back to full K.
    for bk in (512, 256):
        if k_dim > bk and k_dim % bk == 0:
            return bk
    return k_dim


def pallas_linear(x2d, w, b, *, n_splits=1, block_m=256):
    """x2d: (M, K); w: (K, N); b: (N,).

    Returns (M, N), or an n_splits-tuple of (M, N // n_splits) column splits of the
    same matmul (used for the fused Q/K/V projection)."""
    M, K = x2d.shape
    N = w.shape[1]
    split = N // n_splits

    tm = M if M <= block_m else block_m          # full-M block is always legal
    bk = _pick_block_k(K)
    grid = (pl.cdiv(M, tm), K // bk)

    out_shape = tuple(jax.ShapeDtypeStruct((M, split), x2d.dtype)
                      for _ in range(n_splits))
    out_specs = tuple(pl.BlockSpec((tm, split), lambda i, k: (i, 0))
                      for _ in range(n_splits))
    if n_splits == 1:
        out_shape, out_specs = out_shape[0], out_specs[0]

    return pl.pallas_call(
        _make_linear_kernel(n_splits, split),
        out_shape=out_shape,
        grid_spec=pltpu.PrefetchScalarGridSpec(
            num_scalar_prefetch=0,
            grid=grid,
            in_specs=[
                pl.BlockSpec((tm, bk), lambda i, k: (i, k)),   # activation row tile
                pl.BlockSpec((bk, N), lambda i, k: (k, 0)),    # weight (resident over rows)
                pl.BlockSpec((1, N), lambda i, k: (0, 0)),     # bias (resident)
            ],
            out_specs=out_specs,
            scratch_shapes=[pltpu.VMEM((tm, N), jnp.float32)],
        ),
        compiler_params=pltpu.CompilerParams(
            dimension_semantics=("parallel", "arbitrary")),
    )(x2d, w, b.reshape(1, N))


# ----------------------------------------------------------------------------
# Kernel 2: flash-style multi-head attention over (batch, q-tile, kv-tile)
# ----------------------------------------------------------------------------
def _make_attn_kernel(*, num_head, d_t, scale, kv_len, block_kv,
                      has_mask, kv_needs_bounds):
    """q/k/v refs are (1, tq|tk, D) slabs of the (B, S, D) projections; each head is a
    static column slice [h*d_t : (h+1)*d_t].  Running max / sum / output accumulators
    persist in VMEM scratch across the kv-tile grid axis (online softmax)."""

    def kernel(*refs):
        if has_mask:
            q_ref, k_ref, v_ref, msk_ref, o_ref, m_sc, l_sc, acc_sc = refs
        else:
            q_ref, k_ref, v_ref, o_ref, m_sc, l_sc, acc_sc = refs
            msk_ref = None

        ki = pl.program_id(2)

        @pl.when(ki == 0)
        def _():
            m_sc[...] = jnp.full(m_sc.shape, -jnp.inf, m_sc.dtype)
            l_sc[...] = jnp.zeros(l_sc.shape, l_sc.dtype)
            acc_sc[...] = jnp.zeros(acc_sc.shape, acc_sc.dtype)

        q = q_ref[0]                      # (tq, D), keeps input dtype (bf16-friendly)
        k = k_ref[0]                      # (tk, D)
        v = v_ref[0]                      # (tk, D)
        tq, tk = q.shape[0], k.shape[0]

        drop = None                       # (tq, tk) bool: positions forced to -1e9
        if has_mask:
            drop = msk_ref[0] == 0
        if kv_needs_bounds:               # only compiled when S_kv % block_kv != 0
            cols = ki * block_kv + lax.broadcasted_iota(jnp.int32, (tq, tk), 1)
            oob = cols >= kv_len
            drop = oob if drop is None else jnp.logical_or(drop, oob)
            rows_oob = (ki * block_kv
                        + lax.broadcasted_iota(jnp.int32, (tk, 1), 0)) >= kv_len
            v = jnp.where(rows_oob, jnp.zeros_like(v), v)

        for h in range(num_head):
            lo = h * d_t
            q_h = q[:, lo:lo + d_t] * scale        # fold 1/sqrt(d) into q (tq*d elems)
            k_h = k[:, lo:lo + d_t]
            v_h = v[:, lo:lo + d_t]

            # q_h @ k_h^T on the MXU with f32 accumulation.
            s = lax.dot_general(q_h, k_h, (((1,), (1,)), ((), ())),
                                preferred_element_type=jnp.float32)    # (tq, tk)
            if drop is not None:
                s = jnp.where(drop, NEG_INF_FILL, s)

            m_prev = m_sc[h]                                           # (tq, 1)
            m_new = jnp.maximum(m_prev, jnp.max(s, axis=-1, keepdims=True))
            alpha = jnp.exp(m_prev - m_new)
            p = jnp.exp(s - m_new)                                     # (tq, tk) f32
            l_sc[h] = alpha * l_sc[h] + jnp.sum(p, axis=-1, keepdims=True)
            acc_sc[h] = alpha * acc_sc[h] + jnp.dot(
                p.astype(v_h.dtype), v_h, preferred_element_type=jnp.float32)
            m_sc[h] = m_new

        @pl.when(ki == pl.num_programs(2) - 1)
        def _():
            outs = []
            for h in range(num_head):
                inv_l = pl.reciprocal(l_sc[h], approx=True)            # EUP slot
                outs.append(acc_sc[h] * inv_l)
            # heads concatenated in-kernel -> one lane-dense (tq, D) store.
            o_ref[0] = jnp.concatenate(outs, axis=-1).astype(o_ref.dtype)

    return kernel


def pallas_attention(q, k, v, mask, num_head, *, block_q=128, block_kv=128):
    """q: (B, Sq, D); k, v: (B, Sk, D); mask: None or (Bm, Sq, Sk) int32, Bm in {1, B}.
    Returns (B, Sq, D) with heads already concatenated."""
    B, Sq, D = q.shape
    Sk = k.shape[1]
    d_t = D // num_head
    tq = min(block_q, Sq)
    tk = min(block_kv, Sk)
    grid = (B, pl.cdiv(Sq, tq), pl.cdiv(Sk, tk))

    in_specs = [
        pl.BlockSpec((1, tq, D), lambda b, qi, ki: (b, qi, 0)),
        pl.BlockSpec((1, tk, D), lambda b, qi, ki: (b, ki, 0)),
        pl.BlockSpec((1, tk, D), lambda b, qi, ki: (b, ki, 0)),
    ]
    args = [q, k, v]
    if mask is not None:
        if mask.shape[0] == 1:   # shared mask: fetched once per (q,kv) tile, all b/h
            in_specs.append(pl.BlockSpec((1, tq, tk), lambda b, qi, ki: (0, qi, ki)))
        else:
            in_specs.append(pl.BlockSpec((1, tq, tk), lambda b, qi, ki: (b, qi, ki)))
        args.append(mask)

    kernel = _make_attn_kernel(
        num_head=num_head, d_t=d_t, scale=1.0 / math.sqrt(d_t), kv_len=Sk,
        block_kv=tk, has_mask=mask is not None, kv_needs_bounds=(Sk % tk) != 0)

    return pl.pallas_call(
        kernel,
        out_shape=jax.ShapeDtypeStruct((B, Sq, D), q.dtype),
        grid_spec=pltpu.PrefetchScalarGridSpec(
            num_scalar_prefetch=0,
            grid=grid,
            in_specs=in_specs,
            out_specs=pl.BlockSpec((1, tq, D), lambda b, qi, ki: (b, qi, 0)),
            scratch_shapes=[
                pltpu.VMEM((num_head, tq, 1), jnp.float32),    # running max
                pltpu.VMEM((num_head, tq, 1), jnp.float32),    # running sum
                pltpu.VMEM((num_head, tq, d_t), jnp.float32),  # running output acc
            ],
        ),
        compiler_params=pltpu.CompilerParams(
            dimension_semantics=("parallel", "parallel", "arbitrary")),
    )(*args)


# ----------------------------------------------------------------------------
# Module wrapper (glue in plain JAX)
# ----------------------------------------------------------------------------
def _normalize_mask(mask, seq_q):
    """Normalize torch-style masks (nonzero = attend) to a head-invariant
    (Bm, Sq, Sk) int32 tensor. Returns None when mask is None."""
    if mask is None:
        return None
    m = jnp.asarray(mask)
    if m.ndim == 4:
        if m.shape[1] != 1:
            # TODO(synk): per-head (B, H, S, S) masks are not supported by the fused
            # head-invariant mask path; they would need a per-head mask BlockSpec.
            raise NotImplementedError("per-head masks are not supported")
        m = m[:, 0]
    if m.ndim == 2:
        m = m[None]
    if m.shape[-2] == 1:                    # key-padding style (..., 1, Sk)
        m = jnp.broadcast_to(m, m.shape[:-2] + (seq_q, m.shape[-1]))
    return (m != 0).astype(jnp.int32)       # (Bm, Sq, Sk)


def init_mha_params(key, d_model):
    """Deterministic synthetic init. Weights stored pre-transposed as (in, out)."""
    ks = jax.random.split(key, 8)
    bound = 1.0 / math.sqrt(d_model)

    def lin(kw, kb):
        w = jax.random.uniform(kw, (d_model, d_model), jnp.float32, -bound, bound)
        b = jax.random.uniform(kb, (d_model,), jnp.float32, -bound, bound)
        return w, b

    wq, bq = lin(ks[0], ks[1])
    wk, bk = lin(ks[2], ks[3])
    wv, bv = lin(ks[4], ks[5])
    wo, bo = lin(ks[6], ks[7])
    return dict(wq=wq, bq=bq, wk=wk, bk=bk, wv=wv, bv=bv, wo=wo, bo=bo)


def multi_head_attention(params, query, key, value, num_head, mask=None):
    """Forward pass of the PyTorch MultiHeadAttention module."""
    B, Sq, D = query.shape
    Sk = key.shape[1]
    assert D % num_head == 0

    if (query is key) and (query is value):
        # self-attention: one fused pass over the activations produces Q, K and V.
        w_qkv = jnp.concatenate(
            [params["wq"], params["wk"], params["wv"]], axis=1)          # (D, 3D)
        b_qkv = jnp.concatenate([params["bq"], params["bk"], params["bv"]])
        q2, k2, v2 = pallas_linear(query.reshape(B * Sq, D), w_qkv, b_qkv, n_splits=3)
    else:
        q2 = pallas_linear(query.reshape(B * Sq, D), params["wq"], params["bq"])
        k2 = pallas_linear(key.reshape(B * Sk, D), params["wk"], params["bk"])
        v2 = pallas_linear(value.reshape(B * Sk, D), params["wv"], params["bv"])

    q3 = q2.reshape(B, Sq, D)
    k3 = k2.reshape(B, Sk, D)
    v3 = v2.reshape(B, Sk, D)

    mask_n = _normalize_mask(mask, Sq)
    att = pallas_attention(q3, k3, v3, mask_n, num_head)                 # (B, Sq, D)

    return pallas_linear(att.reshape(B * Sq, D),
                         params["wo"], params["bo"]).reshape(B, Sq, D)


# ----------------------------------------------------------------------------
# Pure-JAX reference (for correctness check)
# ----------------------------------------------------------------------------
def mha_reference(params, query, key, value, num_head, mask=None):
    B, Sq, D = query.shape
    Sk = key.shape[1]
    d_t = D // num_head

    def lin(x, w, b):
        return x @ w + b

    def split(x, s_len):
        return x.reshape(B, s_len, num_head, d_t).transpose(0, 2, 1, 3)

    q = split(lin(query, params["wq"], params["bq"]), Sq)
    k = split(lin(key, params["wk"], params["bk"]), Sk)
    v = split(lin(value, params["wv"], params["bv"]), Sk)

    scores = jnp.einsum("bhqd,bhkd->bhqk", q, k) / math.sqrt(d_t)
    if mask is not None:
        scores = jnp.where(mask == 0, -1e9, scores)
    p = jax.nn.softmax(scores, axis=-1)
    att = jnp.einsum("bhqk,bhkd->bhqd", p, v)
    concat = att.transpose(0, 2, 1, 3).reshape(B, Sq, D)
    return lin(concat, params["wo"], params["bo"])


if __name__ == "__main__":
    B, S, D, H = 2, 8, 32, 4   # batch=2, seq=8, d_model=32, num_head=4

    root = jax.random.PRNGKey(0)
    kp, kq, kk, kv_ = jax.random.split(root, 4)

    params = init_mha_params(kp, D)
    x = jax.random.normal(kq, (B, S, D), jnp.float32)
    key_in = jax.random.normal(kk, (B, S, D), jnp.float32)
    value_in = jax.random.normal(kv_, (B, S, D), jnp.float32)

    # 1) self-attention, no mask: fused QKV projection + mask-free flash kernel.
    out_self = multi_head_attention(params, x, x, x, H, mask=None)
    out_self = jax.block_until_ready(out_self)
    ref_self = mha_reference(params, x, x, x, H, mask=None)
    assert out_self.shape == (B, S, D)
    assert jnp.allclose(out_self, ref_self, atol=2e-3, rtol=2e-3), "self-attn mismatch"

    # 2) distinct q/k/v tensors + causal mask: separate projections + masked kernel.
    causal = jnp.tril(jnp.ones((S, S), jnp.float32))
    out_cross = multi_head_attention(params, x, key_in, value_in, H, mask=causal)
    out_cross = jax.block_until_ready(out_cross)
    ref_cross = mha_reference(params, x, key_in, value_in, H, mask=causal)
    assert jnp.allclose(out_cross, ref_cross, atol=2e-3, rtol=2e-3), "masked mismatch"

    print("KERNEL_OK")
</pallas_src>

<mosaic_0001>
module attributes {stable_mosaic.version = 11 : i64} {
  func.func @kernel(%arg0: i32, %arg1: i32, %arg2: memref<16x32xf32, #tpu.memory_space<vmem>>, %arg3: memref<32x96xf32, #tpu.memory_space<vmem>>, %arg4: memref<1x96xf32, #tpu.memory_space<vmem>>, %arg5: memref<16x32xf32, #tpu.memory_space<vmem>>, %arg6: memref<16x32xf32, #tpu.memory_space<vmem>>, %arg7: memref<16x32xf32, #tpu.memory_space<vmem>>, %arg8: memref<16x96xf32, #tpu.memory_space<vmem>>) attributes {dimension_semantics = [#tpu.dimension_semantics<parallel>, #tpu.dimension_semantics<arbitrary>], iteration_bounds = array<i64: 1, 1>, scalar_prefetch = 0 : i64, scratch_operands = 1 : i64, tpu.core_type = #tpu.core_type<tc>, window_params = [{transform_indices = @transform_0, window_bounds = array<i64: 16, 32>}, {transform_indices = @transform_1, window_bounds = array<i64: 32, 96>}, {pipeline_mode = #tpu.pipeline_mode<synchronous>, transform_indices = @transform_2, window_bounds = array<i64: 1, 96>}, {transform_indices = @transform_3, window_bounds = array<i64: 16, 32>}, {transform_indices = @transform_4, window_bounds = array<i64: 16, 32>}, {transform_indices = @transform_5, window_bounds = array<i64: 16, 32>}]} {
    %c0_i32 = arith.constant 0 : i32
    %0 = arith.cmpi eq, %arg1, %c0_i32 : i32
    %1 = arith.extui %0 : i1 to i32
    %c0_i32_0 = arith.constant 0 : i32
    %2 = arith.cmpi ne, %1, %c0_i32_0 : i32
    scf.if %2 {
      %cst_10 = arith.constant 0.000000e+00 : f32
      %12 = vector.broadcast %cst_10 : f32 to vector<16x96xf32>
      %c0_11 = arith.constant 0 : index
      %c0_12 = arith.constant 0 : index
      %13 = vector.load %arg8[%c0_11, %c0_12] : memref<16x96xf32, #tpu.memory_space<vmem>>, vector<16x96xf32>
      tpu.vector_store %arg8[%c0_11, %c0_12], %12 {strides = array<i32>} : memref<16x96xf32, #tpu.memory_space<vmem>>, vector<16x96xf32>,
    } else {
    }
    %c0 = arith.constant 0 : index
    %c0_1 = arith.constant 0 : index
    %3 = vector.load %arg8[%c0, %c0_1] : memref<16x96xf32, #tpu.memory_space<vmem>>, vector<16x96xf32>
    %c0_2 = arith.constant 0 : index
    %c0_3 = arith.constant 0 : index
    %4 = vector.load %arg2[%c0_2, %c0_3] : memref<16x32xf32, #tpu.memory_space<vmem>>, vector<16x32xf32>
    %c0_4 = arith.constant 0 : index
    %c0_5 = arith.constant 0 : index
    %5 = vector.load %arg3[%c0_4, %c0_5] : memref<32x96xf32, #tpu.memory_space<vmem>>, vector<32x96xf32>
    %cst = arith.constant dense<0.000000e+00> : vector<16x96xf32>
    %6 = tpu.matmul %4, %5, %cst {dimension_numbers = #tpu.dot_dimension_numbers<[1], [0], [0], [1], [0, 0, 1, 1], [], []>} : vector<16x32xf32>, vector<32x96xf32>, vector<16x96xf32> -> vector<16x96xf32>
    %7 = arith.addf %3, %6 : vector<16x96xf32>
    %c0_6 = arith.constant 0 : index
    %c0_7 = arith.constant 0 : index
    %8 = vector.load %arg8[%c0_6, %c0_7] : memref<16x96xf32, #tpu.memory_space<vmem>>, vector<16x96xf32>
    tpu.vector_store %arg8[%c0_6, %c0_7], %7 {strides = array<i32>} : memref<16x96xf32, #tpu.memory_space<vmem>>, vector<16x96xf32>,
    %c0_i32_8 = arith.constant 0 : i32
    %9 = arith.cmpi eq, %arg1, %c0_i32_8 : i32
    %10 = arith.extui %9 : i1 to i32
    %c0_i32_9 = arith.constant 0 : i32
    %11 = arith.cmpi ne, %10, %c0_i32_9 : i32
    scf.if %11 {
      %c0_10 = arith.constant 0 : index
      %c0_11 = arith.constant 0 : index
      %12 = vector.load %arg8[%c0_10, %c0_11] : memref<16x96xf32, #tpu.memory_space<vmem>>, vector<16x96xf32>
      %c0_12 = arith.constant 0 : index
      %c0_13 = arith.constant 0 : index
      %13 = vector.load %arg4[%c0_12, %c0_13] : memref<1x96xf32, #tpu.memory_space<vmem>>, vector<1x96xf32>
      %14 = vector.broadcast %13 : vector<1x96xf32> to vector<16x96xf32>
      %15 = arith.addf %12, %14 : vector<16x96xf32>
      %16 = vector.extract_strided_slice %15 {offsets = [0, 0], sizes = [16, 32], strides = [1, 1]} : vector<16x96xf32> to vector<16x32xf32>
      %c0_14 = arith.constant 0 : index
      %c0_15 = arith.constant 0 : index
      %17 = vector.load %arg5[%c0_14, %c0_15] : memref<16x32xf32, #tpu.memory_space<vmem>>, vector<16x32xf32>
      tpu.vector_store %arg5[%c0_14, %c0_15], %16 {strides = array<i32>} : memref<16x32xf32, #tpu.memory_space<vmem>>, vector<16x32xf32>,
      %18 = vector.extract_strided_slice %15 {offsets = [0, 32], sizes = [16, 32], strides = [1, 1]} : vector<16x96xf32> to vector<16x32xf32>
      %c0_16 = arith.constant 0 : index
      %c0_17 = arith.constant 0 : index
      %19 = vector.load %arg6[%c0_16, %c0_17] : memref<16x32xf32, #tpu.memory_space<vmem>>, vector<16x32xf32>
      tpu.vector_store %arg6[%c0_16, %c0_17], %18 {strides = array<i32>} : memref<16x32xf32, #tpu.memory_space<vmem>>, vector<16x32xf32>,
      %20 = vector.extract_strided_slice %15 {offsets = [0, 64], sizes = [16, 32], strides = [1, 1]} : vector<16x96xf32> to vector<16x32xf32>
      %c0_18 = arith.constant 0 : index
      %c0_19 = arith.constant 0 : index
      %21 = vector.load %arg7[%c0_18, %c0_19] : memref<16x32xf32, #tpu.memory_space<vmem>>, vector<16x32xf32>
      tpu.vector_store %arg7[%c0_18, %c0_19], %20 {strides = array<i32>} : memref<16x32xf32, #tpu.memory_space<vmem>>, vector<16x32xf32>,
    } else {
    }
    return
  }
  func.func @transform_0(%arg0: i32, %arg1: i32) -> (i32, i32) {
    %c0_i32 = arith.constant 0 : i32
    return %arg0, %arg1 : i32, i32
  }
  func.func @transform_1(%arg0: i32, %arg1: i32) -> (i32, i32) {
    %c0_i32 = arith.constant 0 : i32
    %c0_i32_0 = arith.constant 0 : i32
    return %arg1, %c0_i32 : i32, i32
  }
  func.func @transform_2(%arg0: i32, %arg1: i32) -> (i32, i32) {
    %c0_i32 = arith.constant 0 : i32
    %c0_i32_0 = arith.constant 0 : i32
    %c0_i32_1 = arith.constant 0 : i32
    return %c0_i32, %c0_i32_0 : i32, i32
  }
  func.func @transform_3(%arg0: i32, %arg1: i32) -> (i32, i32) {
    %c0_i32 = arith.constant 0 : i32
    %c0_i32_0 = arith.constant 0 : i32
    return %arg0, %c0_i32 : i32, i32
  }
  func.func @transform_4(%arg0: i32, %arg1: i32) -> (i32, i32) {
    %c0_i32 = arith.constant 0 : i32
    %c0_i32_0 = arith.constant 0 : i32
    return %arg0, %c0_i32 : i32, i32
  }
  func.func @transform_5(%arg0: i32, %arg1: i32) -> (i32, i32) {
    %c0_i32 = arith.constant 0 : i32
    %c0_i32_0 = arith.constant 0 : i32
    return %arg0, %c0_i32 : i32, i32
  }
}

</mosaic_0001>

<llo_original>
// kernel: tpu_custom_call.1
$region0: #{tpu_custom_call.1}
  #allocation0 [shape = 'u32[]', space=smem, size = 0x4, offset = 0x4, fixed_abs, tag = 'smem constant byte address 0x4 - core index']
  #allocation1 [shape = 'u32[144,128]{1,0:T(1,128)}', space=vmem, size = 0x12000, scoped, tag = 'internal scratch']
  #allocation2 [shape = 'f32[16,96]{1,0:T(8,128)}', space=vmem, size = 0x2000, scoped, tag = 'scratch operand']
  %s0 = inlined_call_operand.hbm [shape: f32[16,32], index: 0, kind: input, shape index: {}]
  %s1 = inlined_call_operand.hbm [shape: f32[32,96], index: 1, kind: input, shape index: {}]
  %s2 = inlined_call_operand.vmem [shape: f32[1,96], index: 2, kind: input, shape index: {}]
  %s3 = inlined_call_operand.hbm [shape: f32[16,32], index: 3, kind: output, shape index: {0}]
  %s4 = inlined_call_operand.hbm [shape: f32[16,32], index: 4, kind: output, shape index: {1}]
  %s5 = inlined_call_operand.hbm [shape: f32[16,32], index: 5, kind: output, shape index: {2}]
  %6 = xla_tuple %s3, %s4, %s5
  %s7 = sld [smem:[#allocation0]]
  $region54: #{tpu_custom_call.1} parent=0
    _
  %s9 = ssub.s32 1, %s7
  %s10 = scalar_select 0, %s9, %s7
  $region1: #{tpu_custom_call.1} parent=0
    #allocation3 [shape = 'u8[8192]{0}', space=vmem, size = 0x2000, scoped, tag = 'input window, operand 0, single buffered']
    #allocation4 [shape = 's32[1]{0}', space=sflag, size = 0x4, scoped, tag = 'scoped memory for tpu_custom_call.1']
    #allocation5 [shape = 's32[1]{0}', space=sflag, size = 0x4, scoped, tag = 'scoped memory for tpu_custom_call.1']
    #allocation6 [shape = 'u8[16384]{0}', space=vmem, size = 0x4000, scoped, tag = 'input window, operand 1, single buffered']
    #allocation7 [shape = 's32[1]{0}', space=sflag, size = 0x4, scoped, tag = 'scoped memory for tpu_custom_call.1']
    #allocation8 [shape = 'u8[8192]{0}', space=vmem, size = 0x2000, scoped, tag = 'output window, operand 0, single buffered']
    #allocation9 [shape = 'u8[8192]{0}', space=vmem, size = 0x2000, scoped, tag = 'output window, operand 1, single buffered']
    #allocation10 [shape = 's32[1]{0}', space=sflag, size = 0x4, scoped, tag = 'scoped memory for tpu_custom_call.1']
    #allocation11 [shape = 'u8[8192]{0}', space=vmem, size = 0x2000, scoped, tag = 'output window, operand 2, single buffered']
    %11 = vsyncpa [#allocation4], 0
    %12 = vsyncpa [#allocation7], 0
    %13 = vsyncpa [#allocation5], 0
    %14 = vsyncpa [#allocation10], 0
    // Predicated region
    $region2: #{tpu_custom_call.1} parent=1 // pred_check
      _
    $region3: #{tpu_custom_call.1} parent=1 // pred_check_branch
      %16 = sbr.rel (0) target = $region5
    $region4: #{tpu_custom_call.1} parent=1 // pred_region
      %s18 = ssub.s32 256, 256
      %19 = vsyncadd [#allocation4], %s18
      %s20 = sshll.u32 [#allocation3], 4
      %s21 = int_to_ptr.vmem [resolvable:$true] %s20
      %26 = dma.hbm_to_vmem [thread:$0]  %s0, 256, %s21, [#allocation4], 128, 128, 8
    $region5: #{tpu_custom_call.1} parent=1 // pred_fallthru
      _
    // Predicated region
    $region6: #{tpu_custom_call.1} parent=1 // pred_check
      _
    $region7: #{tpu_custom_call.1} parent=1 // pred_check_branch
      %28 = sbr.rel (0) target = $region9
    $region8: #{tpu_custom_call.1} parent=1 // pred_region
      %s30 = ssub.s32 512, 512
      %31 = vsyncadd [#allocation7], %s30
      %s32 = sshll.u32 [#allocation6], 4
      %s33 = int_to_ptr.vmem [resolvable:$true] %s32
      %38 = dma.hbm_to_vmem [thread:$0]  %s1, 512, %s33, [#allocation7], 128, 128, 8
    $region9: #{tpu_custom_call.1} parent=1 // pred_fallthru
      _
    // Predicated region
    $region10: #{tpu_custom_call.1} parent=1 // pred_check
      _
    $region11: #{tpu_custom_call.1} parent=1 // pred_check_branch
      %40 = sbr.rel (0) target = $region13
    $region12: #{tpu_custom_call.1} parent=1 // pred_region
      _
    $region13: #{tpu_custom_call.1} parent=1 // pred_fallthru
      _
    // Predicated region
    $region14: #{tpu_custom_call.1} parent=1 // pred_check
      _
    $region15: #{tpu_custom_call.1} parent=1 // pred_check_branch
      %42 = sbr.rel (0) target = $region17
    $region16: #{tpu_custom_call.1} parent=1 // pred_region
      %43 = dma.done [#allocation4], 256
    $region17: #{tpu_custom_call.1} parent=1 // pred_fallthru
      _
    // Predicated region
    $region18: #{tpu_custom_call.1} parent=1 // pred_check
      _
    $region19: #{tpu_custom_call.1} parent=1 // pred_check_branch
      %45 = sbr.rel (0) target = $region21
    $region20: #{tpu_custom_call.1} parent=1 // pred_region
      %46 = dma.done [#allocation7], 512
    $region21: #{tpu_custom_call.1} parent=1 // pred_fallthru
      _
    %p47 = scmp.eq.s32.totalorder 0, 0
    // Predicated region
    $region22: #{tpu_custom_call.1} parent=1 // pred_check
      %p48 = pneg %p47
    $region23: #{tpu_custom_call.1} parent=1 // pred_check_branch
      %50 = sbr.rel (%p48) target = $region25
    $region24: #{tpu_custom_call.1} parent=1 // pred_region
      %vm51 = vcmask 785408
      %52 = vst.msk [vmem:[#allocation2] sm:$0xff] %vm51, 0.0
      %53 = vst.msk [vmem:[#allocation2 + $0x8] sm:$0xff] %vm51, 0.0
    $region25: #{tpu_custom_call.1} parent=1 // pred_fallthru
      _
    %v54 = vld [vmem:[#allocation2] sm:$0xff]
    %v55 = vld [vmem:[#allocation2 + $0x8] sm:$0xff]
    %v56 = vld [vmem:[#allocation3] sm:$0xff]
    %v57 = vld [vmem:[#allocation3 + $0x8] sm:$0xff]
    %v58 = vld [vmem:[#allocation6] sm:$0xff]
    %v59 = vld [vmem:[#allocation6 + $0x8] sm:$0xff]
    %v60 = vld [vmem:[#allocation6 + $0x10] sm:$0xff]
    %v61 = vld [vmem:[#allocation6 + $0x18] sm:$0xff]
    %vm62 = vcmask 261120
    %v64 = vsel %vm62, %v56, 0
    %v67 = vsel %vm62, %v57, 0
    %69 = vmatprep.subr.mxu0 0.0
    %70 = vmatpush1.msra.mxu0 %v58
    %71 = vmatprep.subr.mxu0 0.0
    %72 = vmatpush1.msra.mxu0 %v59
    %73 = vmatprep.subr.mxu0 0.0
    %74 = vmatpush1.msra.mxu0 %v60
    %75 = vmatprep.subr.mxu0 0.0
    %76 = vmatpush1.msra.mxu0 %v61
    %77 = vmatprep.subr.mxu0 0.0
    %78 = vmatpush1.msra.mxu0 0.0
    %79 = vmatprep.subr.mxu0 0.0
    %80 = vmatpush1.msra.mxu0 0.0
    %81 = vmatprep.subr.mxu0 0.0
    %82 = vmatpush1.msra.mxu0 0.0
    %83 = vmatprep.subr.mxu0 0.0
    %84 = vmatpush1.msra.mxu0 0.0
    %85 = vmatprep.subr.mxu0 0.0
    %86 = vmatpush1.msra.mxu0 0.0
    %87 = vmatprep.subr.mxu0 0.0
    %88 = vmatpush1.msra.mxu0 0.0
    %89 = vmatprep.subr.mxu0 0.0
    %90 = vmatpush1.msra.mxu0 0.0
    %91 = vmatprep.subr.mxu0 0.0
    %92 = vmatpush1.msra.mxu0 0.0
    %93 = vmatprep.subr.mxu0 0.0
    %94 = vmatpush1.msra.mxu0 0.0
    %95 = vmatprep.subr.mxu0 0.0
    %96 = vmatpush1.msra.mxu0 0.0
    %97 = vmatprep.subr.mxu0 0.0
    %98 = vmatpush1.msra.mxu0 0.0
    %99 = vmatprep.subr.mxu0 0.0
    %100 = vmatpush1.msra.mxu0 0.0
    %101 = vmatprep.subr.mxu0 0.0
    %102 = vmatpush1.msra.mxu0 0.0
    %103 = vmatprep.subr.mxu0 0.0
    %104 = vmatpush1.msra.mxu0 0.0
    %105 = vmatprep.subr.mxu0 0.0
    %106 = vmatpush1.msra.mxu0 0.0
    %107 = vmatprep.subr.mxu0 0.0
    %108 = vmatpush1.msra.mxu0 0.0
    %109 = vmatprep.subr.mxu0 0.0
    %110 = vmatpush1.msra.mxu0 0.0
    %111 = vmatprep.subr.mxu0 0.0
    %112 = vmatpush1.msra.mxu0 0.0
    %113 = vmatprep.subr.mxu0 0.0
    %114 = vmatpush1.msra.mxu0 0.0
    %115 = vmatprep.subr.mxu0 0.0
    %116 = vmatpush1.msra.mxu0 0.0
    %117 = vmatprep.subr.mxu0 0.0
    %118 = vmatpush1.msra.mxu0 0.0
    %119 = vmatprep.subr.mxu0 0.0
    %120 = vmatpush1.msra.mxu0 0.0
    %121 = vmatprep.subr.mxu0 0.0
    %122 = vmatpush1.msra.mxu0 0.0
    %123 = vmatprep.subr.mxu0 0.0
    %124 = vmatpush1.msra.mxu0 0.0
    %125 = vmatprep.subr.mxu0 0.0
    %126 = vmatpush1.msra.mxu0 0.0
    %127 = vmatprep.subr.mxu0 0.0
    %128 = vmatpush1.msra.mxu0 0.0
    %129 = vmatprep.subr.mxu0 0.0
    %130 = vmatpush1.msra.mxu0 0.0
    %131 = vmatprep.subr.mxu0 0.0
    %132 = vmatpush1.msra.mxu0 0.0
    %133 = vmatprep.mubr.f32.mxu0 0.0
    %134 = vmatmul.mubr.f32.gmra.mrb[0].mxu0 %v64
    %v135 = vpop.f32.mrb[0].mxu0
    %v136 = vadd.f32 0.0, %v135
    %v137 = vpop.f32.mrb[0].mxu0
    %138 = vmatprep.mubr.f32.mxu0 0.0
    %139 = vmatmul.mubr.f32.gmra.mrb[0].mxu0 %v67
    %v140 = vpop.f32.mrb[0].mxu0
    %v141 = vadd.f32 0.0, %v140
    %v142 = vpop.f32.mrb[0].mxu0
    %143 = vdwg.mxu0
    %v144 = vadd.f32 %v54, %v136
    %v145 = vadd.f32 %v55, %v141
    %vm146 = vcmask 785408
    %147 = vst.msk [vmem:[#allocation2] sm:$0xff] %vm146, %v144
    %148 = vst.msk [vmem:[#allocation2 + $0x8] sm:$0xff] %vm146, %v145
    // Predicated region
    $region26: #{tpu_custom_call.1} parent=1 // pred_check
      %p149 = pneg %p47
    $region27: #{tpu_custom_call.1} parent=1 // pred_check_branch
      %151 = sbr.rel (%p149) target = $region29
    $region28: #{tpu_custom_call.1} parent=1 // pred_region
      %v152 = vld [vmem:[#allocation2] sm:$0xff]
      %v153 = vld [vmem:[#allocation2 + $0x8] sm:$0xff]
      %v154 = vld [vmem:[%s2] sm:$0x1]
      %v156 = vlaneseq
      %v157 = vshrl.u32 %v156, 7
      %v158 = vsub.s32 0, %v157
      %v159 = vrot.slane %v154, %v158
      %v161 = vadd.f32 %v152, %v159
      %v162 = vadd.f32 %v153, %v159
      %163 = vst.msk [vmem:[#allocation8] sm:$0xff] %vm62, %v161
      %164 = vst.msk [vmem:[#allocation8 + $0x8] sm:$0xff] %vm62, %v162
      %167 = vrot.lane.b32.xlu0 %v161, 96
      %v168 = vpop.permute.xlu0 %167
      %169 = vrot.lane.b32.xlu0 %v162, 96
      %v170 = vpop.permute.xlu0 %169
      %173 = vst.msk [vmem:[#allocation9] sm:$0xff] %vm62, %v168
      %174 = vst.msk [vmem:[#allocation9 + $0x8] sm:$0xff] %vm62, %v170
      %175 = vrot.lane.b32.xlu0 %v161, 64
      %v176 = vpop.permute.xlu0 %175
      %177 = vrot.lane.b32.xlu0 %v162, 64
      %v178 = vpop.permute.xlu0 %177
      %181 = vst.msk [vmem:[#allocation11] sm:$0xff] %vm62, %v176
      %182 = vst.msk [vmem:[#allocation11 + $0x8] sm:$0xff] %vm62, %v178
    $region29: #{tpu_custom_call.1} parent=1 // pred_fallthru
      _
    // Predicated region
    $region30: #{tpu_custom_call.1} parent=1 // pred_check
      _
    $region31: #{tpu_custom_call.1} parent=1 // pred_check_branch
      %184 = sbr.rel (0) target = $region33
    $region32: #{tpu_custom_call.1} parent=1 // pred_region
      %s186 = ssub.s32 256, 256
      %187 = vsyncadd [#allocation5], %s186
      %s188 = sshll.u32 [#allocation8], 4
      %s189 = int_to_ptr.vmem [resolvable:$true] %s188
      %194 = dma.vmem_to_hbm [thread:$0]  %s189, 256, %s3, [#allocation5], 128, 128, 8
    $region33: #{tpu_custom_call.1} parent=1 // pred_fallthru
      _
    // Predicated region
    $region34: #{tpu_custom_call.1} parent=1 // pred_check
      _
    $region35: #{tpu_custom_call.1} parent=1 // pred_check_branch
      %196 = sbr.rel (0) target = $region37
    $region36: #{tpu_custom_call.1} parent=1 // pred_region
      %s198 = ssub.s32 256, 256
      %199 = vsyncadd [#allocation10], %s198
      %s200 = sshll.u32 [#allocation9], 4
      %s201 = int_to_ptr.vmem [resolvable:$true] %s200
      %206 = dma.vmem_to_hbm [thread:$0]  %s201, 256, %s4, [#allocation10], 128, 128, 8
    $region37: #{tpu_custom_call.1} parent=1 // pred_fallthru
      _
    // Predicated region
    $region38: #{tpu_custom_call.1} parent=1 // pred_check
      _
    $region39: #{tpu_custom_call.1} parent=1 // pred_check_branch
      %208 = sbr.rel (0) target = $region41
    $region40: #{tpu_custom_call.1} parent=1 // pred_region
      %s210 = ssub.s32 256, 256
      %211 = vsyncadd [#allocation10], %s210
      %s212 = sshll.u32 [#allocation11], 4
      %s213 = int_to_ptr.vmem [resolvable:$true] %s212
      %218 = dma.vmem_to_hbm [thread:$0]  %s213, 256, %s5, [#allocation10], 128, 128, 8
    $region41: #{tpu_custom_call.1} parent=1 // pred_fallthru
      _
    // Predicated region
    $region42: #{tpu_custom_call.1} parent=1 // pred_check
      _
    $region43: #{tpu_custom_call.1} parent=1 // pred_check_branch
      %220 = sbr.rel (0) target = $region45
    $region44: #{tpu_custom_call.1} parent=1 // pred_region
      %221 = dma.done [#allocation5], 256
    $region45: #{tpu_custom_call.1} parent=1 // pred_fallthru
      _
    // Predicated region
    $region46: #{tpu_custom_call.1} parent=1 // pred_check
      _
    $region47: #{tpu_custom_call.1} parent=1 // pred_check_branch
      %223 = sbr.rel (0) target = $region49
    $region48: #{tpu_custom_call.1} parent=1 // pred_region
      %224 = dma.done [#allocation10], 256
    $region49: #{tpu_custom_call.1} parent=1 // pred_fallthru
      _
    // Predicated region
    $region50: #{tpu_custom_call.1} parent=1 // pred_check
      _
    $region51: #{tpu_custom_call.1} parent=1 // pred_check_branch
      %226 = sbr.rel (0) target = $region53
    $region52: #{tpu_custom_call.1} parent=1 // pred_region
      %227 = dma.done [#allocation10], 256
    $region53: #{tpu_custom_call.1} parent=1 // pred_fallthru
      _
    %228 = vsyncpa [#allocation4], 1
    %229 = vsyncpa [#allocation7], 1
    %230 = vsyncpa [#allocation5], 1
    %231 = vsyncpa [#allocation10], 1

</llo_original>
